<compile_context>
chip_gen: v7x
topology: tpu7x:2x2x1
jax: 0.10.0
libtpu: 0.0.40
codegen_flags: <defaults>
</compile_context>

<pallas_src>
import jax
import jax.numpy as jnp
from jax.experimental import pallas as pl
from jax.experimental.pallas import tpu as pltpu


def _gelu_fast(x):
    # HF ACT2FN['gelu_fast'] == FastGELUActivation:
    # 0.5 * x * (1 + tanh(x * 0.7978845608 * (1 + 0.044715 * x * x)))
    return 0.5 * x * (1.0 + jnp.tanh(x * 0.7978845608028654 * (1.0 + 0.044715 * x * x)))


def _mlp_kernel(x_ref, wg_ref, wu_ref, wd_ref, o_ref, acc_ref):
    j = pl.program_id(1)  # I-tile index (reduction axis, last in the grid)

    @pl.when(j == 0)
    def _():
        acc_ref[...] = jnp.zeros_like(acc_ref)

    x = x_ref[...]                                                    # (tm, H)
    g = jnp.dot(x, wg_ref[...], preferred_element_type=jnp.float32)   # (tm, ti)
    u = jnp.dot(x, wu_ref[...], preferred_element_type=jnp.float32)   # (tm, ti)
    h = _gelu_fast(g) * u                                             # f32 elementwise (EUP tanh)
    acc_ref[...] += jnp.dot(h.astype(x.dtype), wd_ref[...],
                            preferred_element_type=jnp.float32)       # (tm, H)

    @pl.when(j == pl.num_programs(1) - 1)
    def _():
        o_ref[...] = acc_ref[...].astype(o_ref.dtype)


def deepseek_v3_mlp(x, w_gate, w_up, w_down, *, tm=256, ti=512):
    """x: (..., H). w_gate/w_up: (H, I). w_down: (I, H). Weights pre-transposed to (in, out)."""
    orig_shape = x.shape
    H = orig_shape[-1]
    I = w_gate.shape[1]
    x2d = x.reshape(-1, H)
    M = x2d.shape[0]

    # ---- row tile: fill the MXU, pad ragged token counts -------------------
    if M < tm:
        tm = M                      # single block covering the full token dim
    m_pad = ((M + tm - 1) // tm) * tm
    if m_pad != M:
        x2d = jnp.pad(x2d, ((0, m_pad - M), (0, 0)))

    # ---- intermediate tile: must divide I and be lane-aligned (128) --------
    if I <= ti:
        ti = I                      # single block covering full I
    else:
        while ti > 128 and I % ti != 0:
            ti //= 2
        if I % ti != 0:
            ti = I                  # fallback: stage the full intermediate dim

    grid = (m_pad // tm, I // ti)

    cost = pl.CostEstimate(
        flops=6 * M * H * I,                       # 3 matmuls x 2*M*H*I
        transcendentals=M * I,                     # tanh in gelu_fast
        bytes_accessed=(x2d.size * x2d.dtype.itemsize
                        + (w_gate.size + w_up.size + w_down.size) * w_gate.dtype.itemsize
                        + m_pad * H * x.dtype.itemsize),
    )

    out = pl.pallas_call(
        _mlp_kernel,
        out_shape=jax.ShapeDtypeStruct((m_pad, H), x.dtype),
        grid_spec=pltpu.PrefetchScalarGridSpec(
            num_scalar_prefetch=0,
            grid=grid,
            in_specs=[
                pl.BlockSpec((tm, H), lambda i, j: (i, 0)),   # x row tile (reused across I tiles)
                pl.BlockSpec((H, ti), lambda i, j: (0, j)),   # gate weight tile
                pl.BlockSpec((H, ti), lambda i, j: (0, j)),   # up weight tile
                pl.BlockSpec((ti, H), lambda i, j: (j, 0)),   # down weight tile
            ],
            out_specs=pl.BlockSpec((tm, H), lambda i, j: (i, 0)),
            scratch_shapes=[pltpu.VMEM((tm, H), jnp.float32)],  # f32 down-proj accumulator
        ),
        compiler_params=pltpu.CompilerParams(
            dimension_semantics=("parallel", "arbitrary"),
            vmem_limit_bytes=64 * 1024 * 1024,   # safe on v5e/v6e/v7x; room for dbl-buffered tiles
        ),
        cost_estimate=cost,
    )(x2d, w_gate, w_up, w_down)

    if m_pad != M:
        out = out[:M]
    return out.reshape(orig_shape)


def _reference(x, w_gate, w_up, w_down):
    g = x @ w_gate
    u = x @ w_up
    return (_gelu_fast(g) * u) @ w_down


if __name__ == "__main__":
    # Small shapes consistent with the module: hidden=32, intermediate=32.
    B, S, H, I = 2, 8, 32, 32
    key = jax.random.PRNGKey(0)
    kx, kg, ku, kd = jax.random.split(key, 4)

    x = jax.random.normal(kx, (B, S, H), dtype=jnp.float32)
    # Deterministic "Linear(bias=False)" weights, stored as (in, out).
    w_gate = jax.random.normal(kg, (H, I), dtype=jnp.float32) * (1.0 / jnp.sqrt(H))
    w_up = jax.random.normal(ku, (H, I), dtype=jnp.float32) * (1.0 / jnp.sqrt(H))
    w_down = jax.random.normal(kd, (I, H), dtype=jnp.float32) * (1.0 / jnp.sqrt(I))

    out = deepseek_v3_mlp(x, w_gate, w_up, w_down)
    out = jax.block_until_ready(out)

    ref = _reference(x, w_gate, w_up, w_down)
    assert out.shape == (B, S, H)
    assert jnp.allclose(out, ref, atol=1e-4, rtol=1e-4), "mismatch vs reference"

    print("KERNEL_OK")
</pallas_src>

<mosaic_0001>
module attributes {stable_mosaic.version = 11 : i64} {
  func.func @_mlp_kernel(%arg0: i32, %arg1: i32, %arg2: memref<16x32xf32, #tpu.memory_space<vmem>>, %arg3: memref<32x32xf32, #tpu.memory_space<vmem>>, %arg4: memref<32x32xf32, #tpu.memory_space<vmem>>, %arg5: memref<32x32xf32, #tpu.memory_space<vmem>>, %arg6: memref<16x32xf32, #tpu.memory_space<vmem>>, %arg7: memref<16x32xf32, #tpu.memory_space<vmem>>) attributes {dimension_semantics = [#tpu.dimension_semantics<parallel>, #tpu.dimension_semantics<arbitrary>], iteration_bounds = array<i64: 1, 1>, scalar_prefetch = 0 : i64, scratch_operands = 1 : i64, tpu.core_type = #tpu.core_type<tc>, window_params = [{transform_indices = @transform_0, window_bounds = array<i64: 16, 32>}, {transform_indices = @transform_1, window_bounds = array<i64: 32, 32>}, {transform_indices = @transform_2, window_bounds = array<i64: 32, 32>}, {transform_indices = @transform_3, window_bounds = array<i64: 32, 32>}, {transform_indices = @transform_4, window_bounds = array<i64: 16, 32>}]} {
    %c0_i32 = arith.constant 0 : i32
    %0 = arith.cmpi eq, %arg1, %c0_i32 : i32
    %1 = arith.extui %0 : i1 to i32
    %c0_i32_0 = arith.constant 0 : i32
    %2 = arith.cmpi ne, %1, %c0_i32_0 : i32
    scf.if %2 {
      %cst_21 = arith.constant 0.000000e+00 : f32
      %31 = vector.broadcast %cst_21 : f32 to vector<16x32xf32>
      %c0_22 = arith.constant 0 : index
      %c0_23 = arith.constant 0 : index
      %32 = vector.load %arg7[%c0_22, %c0_23] : memref<16x32xf32, #tpu.memory_space<vmem>>, vector<16x32xf32>
      tpu.vector_store %arg7[%c0_22, %c0_23], %31 {strides = array<i32>} : memref<16x32xf32, #tpu.memory_space<vmem>>, vector<16x32xf32>,
    } else {
    }
    %c0 = arith.constant 0 : index
    %c0_1 = arith.constant 0 : index
    %3 = vector.load %arg2[%c0, %c0_1] : memref<16x32xf32, #tpu.memory_space<vmem>>, vector<16x32xf32>
    %c0_2 = arith.constant 0 : index
    %c0_3 = arith.constant 0 : index
    %4 = vector.load %arg3[%c0_2, %c0_3] : memref<32x32xf32, #tpu.memory_space<vmem>>, vector<32x32xf32>
    %cst = arith.constant dense<0.000000e+00> : vector<16x32xf32>
    %5 = tpu.matmul %3, %4, %cst {dimension_numbers = #tpu.dot_dimension_numbers<[1], [0], [0], [1], [0, 0, 1, 1], [], []>} : vector<16x32xf32>, vector<32x32xf32>, vector<16x32xf32> -> vector<16x32xf32>
    %c0_4 = arith.constant 0 : index
    %c0_5 = arith.constant 0 : index
    %6 = vector.load %arg4[%c0_4, %c0_5] : memref<32x32xf32, #tpu.memory_space<vmem>>, vector<32x32xf32>
    %cst_6 = arith.constant dense<0.000000e+00> : vector<16x32xf32>
    %7 = tpu.matmul %3, %6, %cst_6 {dimension_numbers = #tpu.dot_dimension_numbers<[1], [0], [0], [1], [0, 0, 1, 1], [], []>} : vector<16x32xf32>, vector<32x32xf32>, vector<16x32xf32> -> vector<16x32xf32>
    %cst_7 = arith.constant 5.000000e-01 : f32
    %8 = vector.broadcast %cst_7 : f32 to vector<16x32xf32>
    %9 = arith.mulf %8, %5 : vector<16x32xf32>
    %cst_8 = arith.constant 0.797884583 : f32
    %10 = vector.broadcast %cst_8 : f32 to vector<16x32xf32>
    %11 = arith.mulf %5, %10 : vector<16x32xf32>
    %cst_9 = arith.constant 4.471500e-02 : f32
    %12 = vector.broadcast %cst_9 : f32 to vector<16x32xf32>
    %13 = arith.mulf %12, %5 : vector<16x32xf32>
    %14 = arith.mulf %13, %5 : vector<16x32xf32>
    %cst_10 = arith.constant 1.000000e+00 : f32
    %15 = vector.broadcast %cst_10 : f32 to vector<16x32xf32>
    %16 = arith.addf %15, %14 : vector<16x32xf32>
    %17 = arith.mulf %11, %16 : vector<16x32xf32>
    %18 = math.tanh %17 : vector<16x32xf32>
    %cst_11 = arith.constant 1.000000e+00 : f32
    %19 = vector.broadcast %cst_11 : f32 to vector<16x32xf32>
    %20 = arith.addf %19, %18 : vector<16x32xf32>
    %21 = arith.mulf %9, %20 : vector<16x32xf32>
    %22 = arith.mulf %21, %7 : vector<16x32xf32>
    %c0_12 = arith.constant 0 : index
    %c0_13 = arith.constant 0 : index
    %23 = vector.load %arg7[%c0_12, %c0_13] : memref<16x32xf32, #tpu.memory_space<vmem>>, vector<16x32xf32>
    %c0_14 = arith.constant 0 : index
    %c0_15 = arith.constant 0 : index
    %24 = vector.load %arg5[%c0_14, %c0_15] : memref<32x32xf32, #tpu.memory_space<vmem>>, vector<32x32xf32>
    %cst_16 = arith.constant dense<0.000000e+00> : vector<16x32xf32>
    %25 = tpu.matmul %22, %24, %cst_16 {dimension_numbers = #tpu.dot_dimension_numbers<[1], [0], [0], [1], [0, 0, 1, 1], [], []>} : vector<16x32xf32>, vector<32x32xf32>, vector<16x32xf32> -> vector<16x32xf32>
    %26 = arith.addf %23, %25 : vector<16x32xf32>
    %c0_17 = arith.constant 0 : index
    %c0_18 = arith.constant 0 : index
    %27 = vector.load %arg7[%c0_17, %c0_18] : memref<16x32xf32, #tpu.memory_space<vmem>>, vector<16x32xf32>
    tpu.vector_store %arg7[%c0_17, %c0_18], %26 {strides = array<i32>} : memref<16x32xf32, #tpu.memory_space<vmem>>, vector<16x32xf32>,
    %c0_i32_19 = arith.constant 0 : i32
    %28 = arith.cmpi eq, %arg1, %c0_i32_19 : i32
    %29 = arith.extui %28 : i1 to i32
    %c0_i32_20 = arith.constant 0 : i32
    %30 = arith.cmpi ne, %29, %c0_i32_20 : i32
    scf.if %30 {
      %c0_21 = arith.constant 0 : index
      %c0_22 = arith.constant 0 : index
      %31 = vector.load %arg7[%c0_21, %c0_22] : memref<16x32xf32, #tpu.memory_space<vmem>>, vector<16x32xf32>
      %c0_23 = arith.constant 0 : index
      %c0_24 = arith.constant 0 : index
      %32 = vector.load %arg6[%c0_23, %c0_24] : memref<16x32xf32, #tpu.memory_space<vmem>>, vector<16x32xf32>
      tpu.vector_store %arg6[%c0_23, %c0_24], %31 {strides = array<i32>} : memref<16x32xf32, #tpu.memory_space<vmem>>, vector<16x32xf32>,
    } else {
    }
    return
  }
  func.func @transform_0(%arg0: i32, %arg1: i32) -> (i32, i32) {
    %c0_i32 = arith.constant 0 : i32
    %c0_i32_0 = arith.constant 0 : i32
    return %arg0, %c0_i32 : i32, i32
  }
  func.func @transform_1(%arg0: i32, %arg1: i32) -> (i32, i32) {
    %c0_i32 = arith.constant 0 : i32
    %c0_i32_0 = arith.constant 0 : i32
    return %c0_i32, %arg1 : i32, i32
  }
  func.func @transform_2(%arg0: i32, %arg1: i32) -> (i32, i32) {
    %c0_i32 = arith.constant 0 : i32
    %c0_i32_0 = arith.constant 0 : i32
    return %c0_i32, %arg1 : i32, i32
  }
  func.func @transform_3(%arg0: i32, %arg1: i32) -> (i32, i32) {
    %c0_i32 = arith.constant 0 : i32
    %c0_i32_0 = arith.constant 0 : i32
    return %arg1, %c0_i32 : i32, i32
  }
  func.func @transform_4(%arg0: i32, %arg1: i32) -> (i32, i32) {
    %c0_i32 = arith.constant 0 : i32
    %c0_i32_0 = arith.constant 0 : i32
    return %arg0, %c0_i32 : i32, i32
  }
}

</mosaic_0001>

<llo_original>
// kernel: tpu_custom_call.1
$region0: #{tpu_custom_call.1}
  #allocation0 [shape = 'u32[]', space=smem, size = 0x4, offset = 0x4, fixed_abs, tag = 'smem constant byte address 0x4 - core index']
  #allocation1 [shape = 'u32[144,128]{1,0:T(1,128)}', space=vmem, size = 0x12000, scoped, tag = 'internal scratch']
  #allocation2 [shape = 'f32[16,32]{1,0:T(8,128)}', space=vmem, size = 0x2000, scoped, tag = 'scratch operand']
  %s0 = inlined_call_operand.hbm [shape: f32[16,32], index: 0, kind: input, shape index: {}]
  %s1 = inlined_call_operand.hbm [shape: f32[32,32], index: 1, kind: input, shape index: {}]
  %s2 = inlined_call_operand.hbm [shape: f32[32,32], index: 2, kind: input, shape index: {}]
  %s3 = inlined_call_operand.hbm [shape: f32[32,32], index: 3, kind: input, shape index: {}]
  %s4 = inlined_call_operand.hbm [shape: f32[16,32], index: 4, kind: output, shape index: {}]
  %s5 = sld [smem:[#allocation0]]
  $region50: #{tpu_custom_call.1} parent=0
    _
  %s7 = ssub.s32 1, %s5
  %s8 = scalar_select 0, %s7, %s5
  $region1: #{tpu_custom_call.1} parent=0
    #allocation3 [shape = 'u8[8192]{0}', space=vmem, size = 0x2000, scoped, tag = 'input window, operand 0, single buffered']
    #allocation4 [shape = 's32[1]{0}', space=sflag, size = 0x4, scoped, tag = 'scoped memory for tpu_custom_call.1']
    #allocation5 [shape = 's32[1]{0}', space=sflag, size = 0x4, scoped, tag = 'scoped memory for tpu_custom_call.1']
    #allocation6 [shape = 'u8[16384]{0}', space=vmem, size = 0x4000, scoped, tag = 'input window, operand 1, single buffered']
    #allocation7 [shape = 's32[1]{0}', space=sflag, size = 0x4, scoped, tag = 'scoped memory for tpu_custom_call.1']
    #allocation8 [shape = 'u8[16384]{0}', space=vmem, size = 0x4000, scoped, tag = 'input window, operand 2, single buffered']
    #allocation9 [shape = 'u8[16384]{0}', space=vmem, size = 0x4000, scoped, tag = 'input window, operand 3, single buffered']
    #allocation10 [shape = 's32[1]{0}', space=sflag, size = 0x4, scoped, tag = 'scoped memory for tpu_custom_call.1']
    #allocation11 [shape = 'u8[8192]{0}', space=vmem, size = 0x2000, scoped, tag = 'output window, operand 0, single buffered']
    %9 = vsyncpa [#allocation4], 0
    %10 = vsyncpa [#allocation7], 0
    %11 = vsyncpa [#allocation10], 0
    %12 = vsyncpa [#allocation5], 0
    // Predicated region
    $region2: #{tpu_custom_call.1} parent=1 // pred_check
      _
    $region3: #{tpu_custom_call.1} parent=1 // pred_check_branch
      %14 = sbr.rel (0) target = $region5
    $region4: #{tpu_custom_call.1} parent=1 // pred_region
      %s16 = ssub.s32 256, 256
      %17 = vsyncadd [#allocation4], %s16
      %s18 = sshll.u32 [#allocation3], 4
      %s19 = int_to_ptr.vmem [resolvable:$true] %s18
      %24 = dma.hbm_to_vmem [thread:$0]  %s0, 256, %s19, [#allocation4], 128, 128, 8
    $region5: #{tpu_custom_call.1} parent=1 // pred_fallthru
      _
    // Predicated region
    $region6: #{tpu_custom_call.1} parent=1 // pred_check
      _
    $region7: #{tpu_custom_call.1} parent=1 // pred_check_branch
      %26 = sbr.rel (0) target = $region9
    $region8: #{tpu_custom_call.1} parent=1 // pred_region
      %s28 = ssub.s32 512, 512
      %29 = vsyncadd [#allocation7], %s28
      %s30 = sshll.u32 [#allocation6], 4
      %s31 = int_to_ptr.vmem [resolvable:$true] %s30
      %36 = dma.hbm_to_vmem [thread:$0]  %s1, 512, %s31, [#allocation7], 128, 128, 8
    $region9: #{tpu_custom_call.1} parent=1 // pred_fallthru
      _
    // Predicated region
    $region10: #{tpu_custom_call.1} parent=1 // pred_check
      _
    $region11: #{tpu_custom_call.1} parent=1 // pred_check_branch
      %38 = sbr.rel (0) target = $region13
    $region12: #{tpu_custom_call.1} parent=1 // pred_region
      %s40 = ssub.s32 512, 512
      %41 = vsyncadd [#allocation7], %s40
      %s42 = sshll.u32 [#allocation8], 4
      %s43 = int_to_ptr.vmem [resolvable:$true] %s42
      %48 = dma.hbm_to_vmem [thread:$0]  %s2, 512, %s43, [#allocation7], 128, 128, 8
    $region13: #{tpu_custom_call.1} parent=1 // pred_fallthru
      _
    // Predicated region
    $region14: #{tpu_custom_call.1} parent=1 // pred_check
      _
    $region15: #{tpu_custom_call.1} parent=1 // pred_check_branch
      %50 = sbr.rel (0) target = $region17
    $region16: #{tpu_custom_call.1} parent=1 // pred_region
      %s52 = ssub.s32 512, 512
      %53 = vsyncadd [#allocation10], %s52
      %s54 = sshll.u32 [#allocation9], 4
      %s55 = int_to_ptr.vmem [resolvable:$true] %s54
      %60 = dma.hbm_to_vmem [thread:$0]  %s3, 512, %s55, [#allocation10], 128, 128, 8
    $region17: #{tpu_custom_call.1} parent=1 // pred_fallthru
      _
    // Predicated region
    $region18: #{tpu_custom_call.1} parent=1 // pred_check
      _
    $region19: #{tpu_custom_call.1} parent=1 // pred_check_branch
      %62 = sbr.rel (0) target = $region21
    $region20: #{tpu_custom_call.1} parent=1 // pred_region
      %63 = dma.done [#allocation4], 256
    $region21: #{tpu_custom_call.1} parent=1 // pred_fallthru
      _
    // Predicated region
    $region22: #{tpu_custom_call.1} parent=1 // pred_check
      _
    $region23: #{tpu_custom_call.1} parent=1 // pred_check_branch
      %65 = sbr.rel (0) target = $region25
    $region24: #{tpu_custom_call.1} parent=1 // pred_region
      %66 = dma.done [#allocation7], 512
    $region25: #{tpu_custom_call.1} parent=1 // pred_fallthru
      _
    // Predicated region
    $region26: #{tpu_custom_call.1} parent=1 // pred_check
      _
    $region27: #{tpu_custom_call.1} parent=1 // pred_check_branch
      %68 = sbr.rel (0) target = $region29
    $region28: #{tpu_custom_call.1} parent=1 // pred_region
      %69 = dma.done [#allocation7], 512
    $region29: #{tpu_custom_call.1} parent=1 // pred_fallthru
      _
    // Predicated region
    $region30: #{tpu_custom_call.1} parent=1 // pred_check
      _
    $region31: #{tpu_custom_call.1} parent=1 // pred_check_branch
      %71 = sbr.rel (0) target = $region33
    $region32: #{tpu_custom_call.1} parent=1 // pred_region
      %72 = dma.done [#allocation10], 512
    $region33: #{tpu_custom_call.1} parent=1 // pred_fallthru
      _
    %p73 = scmp.eq.s32.totalorder 0, 0
    // Predicated region
    $region34: #{tpu_custom_call.1} parent=1 // pred_check
      %p74 = pneg %p73
    $region35: #{tpu_custom_call.1} parent=1 // pred_check_branch
      %76 = sbr.rel (%p74) target = $region37
    $region36: #{tpu_custom_call.1} parent=1 // pred_region
      %vm77 = vcmask 261120
      %78 = vst.msk [vmem:[#allocation2] sm:$0xff] %vm77, 0.0
      %79 = vst.msk [vmem:[#allocation2 + $0x8] sm:$0xff] %vm77, 0.0
    $region37: #{tpu_custom_call.1} parent=1 // pred_fallthru
      _
    %v80 = vld [vmem:[#allocation3] sm:$0xff]
    %v81 = vld [vmem:[#allocation3 + $0x8] sm:$0xff]
    %v82 = vld [vmem:[#allocation6] sm:$0xff]
    %v83 = vld [vmem:[#allocation6 + $0x8] sm:$0xff]
    %v84 = vld [vmem:[#allocation6 + $0x10] sm:$0xff]
    %v85 = vld [vmem:[#allocation6 + $0x18] sm:$0xff]
    %vm86 = vcmask 261120
    %v88 = vsel %vm86, %v80, 0
    %v91 = vsel %vm86, %v81, 0
    %93 = vmatprep.subr.mxu0 0.0
    %94 = vmatpush1.msra.mxu0 %v82
    %95 = vmatprep.subr.mxu0 0.0
    %96 = vmatpush1.msra.mxu0 %v83
    %97 = vmatprep.subr.mxu0 0.0
    %98 = vmatpush1.msra.mxu0 %v84
    %99 = vmatprep.subr.mxu0 0.0
    %100 = vmatpush1.msra.mxu0 %v85
    %101 = vmatprep.subr.mxu0 0.0
    %102 = vmatpush1.msra.mxu0 0.0
    %103 = vmatprep.subr.mxu0 0.0
    %104 = vmatpush1.msra.mxu0 0.0
    %105 = vmatprep.subr.mxu0 0.0
    %106 = vmatpush1.msra.mxu0 0.0
    %107 = vmatprep.subr.mxu0 0.0
    %108 = vmatpush1.msra.mxu0 0.0
    %109 = vmatprep.subr.mxu0 0.0
    %110 = vmatpush1.msra.mxu0 0.0
    %111 = vmatprep.subr.mxu0 0.0
    %112 = vmatpush1.msra.mxu0 0.0
    %113 = vmatprep.subr.mxu0 0.0
    %114 = vmatpush1.msra.mxu0 0.0
    %115 = vmatprep.subr.mxu0 0.0
    %116 = vmatpush1.msra.mxu0 0.0
    %117 = vmatprep.subr.mxu0 0.0
    %118 = vmatpush1.msra.mxu0 0.0
    %119 = vmatprep.subr.mxu0 0.0
    %120 = vmatpush1.msra.mxu0 0.0
    %121 = vmatprep.subr.mxu0 0.0
    %122 = vmatpush1.msra.mxu0 0.0
    %123 = vmatprep.subr.mxu0 0.0
    %124 = vmatpush1.msra.mxu0 0.0
    %125 = vmatprep.subr.mxu0 0.0
    %126 = vmatpush1.msra.mxu0 0.0
    %127 = vmatprep.subr.mxu0 0.0
    %128 = vmatpush1.msra.mxu0 0.0
    %129 = vmatprep.subr.mxu0 0.0
    %130 = vmatpush1.msra.mxu0 0.0
    %131 = vmatprep.subr.mxu0 0.0
    %132 = vmatpush1.msra.mxu0 0.0
    %133 = vmatprep.subr.mxu0 0.0
    %134 = vmatpush1.msra.mxu0 0.0
    %135 = vmatprep.subr.mxu0 0.0
    %136 = vmatpush1.msra.mxu0 0.0
    %137 = vmatprep.subr.mxu0 0.0
    %138 = vmatpush1.msra.mxu0 0.0
    %139 = vmatprep.subr.mxu0 0.0
    %140 = vmatpush1.msra.mxu0 0.0
    %141 = vmatprep.subr.mxu0 0.0
    %142 = vmatpush1.msra.mxu0 0.0
    %143 = vmatprep.subr.mxu0 0.0
    %144 = vmatpush1.msra.mxu0 0.0
    %145 = vmatprep.subr.mxu0 0.0
    %146 = vmatpush1.msra.mxu0 0.0
    %147 = vmatprep.subr.mxu0 0.0
    %148 = vmatpush1.msra.mxu0 0.0
    %149 = vmatprep.subr.mxu0 0.0
    %150 = vmatpush1.msra.mxu0 0.0
    %151 = vmatprep.subr.mxu0 0.0
    %152 = vmatpush1.msra.mxu0 0.0
    %153 = vmatprep.subr.mxu0 0.0
    %154 = vmatpush1.msra.mxu0 0.0
    %155 = vmatprep.subr.mxu0 0.0
    %156 = vmatpush1.msra.mxu0 0.0
    %157 = vmatprep.mubr.f32.mxu0 0.0
    %158 = vmatmul.mubr.f32.gmra.mrb[0].mxu0 %v88
    %v159 = vpop.f32.mrb[0].mxu0
    %v160 = vadd.f32 0.0, %v159
    %v161 = vpop.f32.mrb[0].mxu0
    %162 = vmatprep.mubr.f32.mxu0 0.0
    %163 = vmatmul.mubr.f32.gmra.mrb[0].mxu0 %v91
    %v164 = vpop.f32.mrb[0].mxu0
    %v165 = vadd.f32 0.0, %v164
    %v166 = vpop.f32.mrb[0].mxu0
    %167 = vdwg.mxu0
    %v168 = vld [vmem:[#allocation8] sm:$0xff]
    %v169 = vld [vmem:[#allocation8 + $0x8] sm:$0xff]
    %v170 = vld [vmem:[#allocation8 + $0x10] sm:$0xff]
    %v171 = vld [vmem:[#allocation8 + $0x18] sm:$0xff]
    %172 = vmatprep.subr.mxu0 0.0
    %173 = vmatpush1.msra.mxu0 %v168
    %174 = vmatprep.subr.mxu0 0.0
    %175 = vmatpush1.msra.mxu0 %v169
    %176 = vmatprep.subr.mxu0 0.0
    %177 = vmatpush1.msra.mxu0 %v170
    %178 = vmatprep.subr.mxu0 0.0
    %179 = vmatpush1.msra.mxu0 %v171
    %180 = vmatprep.subr.mxu0 0.0
    %181 = vmatpush1.msra.mxu0 0.0
    %182 = vmatprep.subr.mxu0 0.0
    %183 = vmatpush1.msra.mxu0 0.0
    %184 = vmatprep.subr.mxu0 0.0
    %185 = vmatpush1.msra.mxu0 0.0
    %186 = vmatprep.subr.mxu0 0.0
    %187 = vmatpush1.msra.mxu0 0.0
    %188 = vmatprep.subr.mxu0 0.0
    %189 = vmatpush1.msra.mxu0 0.0
    %190 = vmatprep.subr.mxu0 0.0
    %191 = vmatpush1.msra.mxu0 0.0
    %192 = vmatprep.subr.mxu0 0.0
    %193 = vmatpush1.msra.mxu0 0.0
    %194 = vmatprep.subr.mxu0 0.0
    %195 = vmatpush1.msra.mxu0 0.0
    %196 = vmatprep.subr.mxu0 0.0
    %197 = vmatpush1.msra.mxu0 0.0
    %198 = vmatprep.subr.mxu0 0.0
    %199 = vmatpush1.msra.mxu0 0.0
    %200 = vmatprep.subr.mxu0 0.0
    %201 = vmatpush1.msra.mxu0 0.0
    %202 = vmatprep.subr.mxu0 0.0
    %203 = vmatpush1.msra.mxu0 0.0
    %204 = vmatprep.subr.mxu0 0.0
    %205 = vmatpush1.msra.mxu0 0.0
    %206 = vmatprep.subr.mxu0 0.0
    %207 = vmatpush1.msra.mxu0 0.0
    %208 = vmatprep.subr.mxu0 0.0
    %209 = vmatpush1.msra.mxu0 0.0
    %210 = vmatprep.subr.mxu0 0.0
    %211 = vmatpush1.msra.mxu0 0.0
    %212 = vmatprep.subr.mxu0 0.0
    %213 = vmatpush1.msra.mxu0 0.0
    %214 = vmatprep.subr.mxu0 0.0
    %215 = vmatpush1.msra.mxu0 0.0
    %216 = vmatprep.subr.mxu0 0.0
    %217 = vmatpush1.msra.mxu0 0.0
    %218 = vmatprep.subr.mxu0 0.0
    %219 = vmatpush1.msra.mxu0 0.0
    %220 = vmatprep.subr.mxu0 0.0
    %221 = vmatpush1.msra.mxu0 0.0
    %222 = vmatprep.subr.mxu0 0.0
    %223 = vmatpush1.msra.mxu0 0.0
    %224 = vmatprep.subr.mxu0 0.0
    %225 = vmatpush1.msra.mxu0 0.0
    %226 = vmatprep.subr.mxu0 0.0
    %227 = vmatpush1.msra.mxu0 0.0
    %228 = vmatprep.subr.mxu0 0.0
    %229 = vmatpush1.msra.mxu0 0.0
    %230 = vmatprep.subr.mxu0 0.0
    %231 = vmatpush1.msra.mxu0 0.0
    %232 = vmatprep.subr.mxu0 0.0
    %233 = vmatpush1.msra.mxu0 0.0
    %234 = vmatprep.subr.mxu0 0.0
    %235 = vmatpush1.msra.mxu0 0.0
    %236 = vmatprep.mubr.f32.mxu0 0.0
    %237 = vmatmul.mubr.f32.gmra.mrb[0].mxu0 %v88
    %v238 = vpop.f32.mrb[0].mxu0
    %v239 = vadd.f32 0.0, %v238
    %v240 = vpop.f32.mrb[0].mxu0
    %241 = vmatprep.mubr.f32.mxu0 0.0
    %242 = vmatmul.mubr.f32.gmra.mrb[0].mxu0 %v91
    %v243 = vpop.f32.mrb[0].mxu0
    %v244 = vadd.f32 0.0, %v243
    %v245 = vpop.f32.mrb[0].mxu0
    %246 = vdwg.mxu0
    %v247 = vmul.f32 %v160, 0.5
    %v248 = vmul.f32 %v165, 0.5
    %v249 = vmul.f32 %v160, 0.7978846
    %v250 = vmul.f32 %v165, 0.7978846
    %v251 = vmul.f32 %v160, 0.044715
    %v252 = vmul.f32 %v165, 0.044715
    %v253 = vmul.f32 %v251, %v160
    %v254 = vmul.f32 %v252, %v165
    %v255 = vadd.f32 %v253, 1.0
    %v256 = vadd.f32 %v254, 1.0
    %v257 = vmul.f32 %v249, %v255
    %v258 = vmul.f32 %v250, %v256
    %v259 = vtanh.pop %v257
    %v260 = vtanh.pop %v258
    %v261 = vadd.f32 %v259, 1.0
    %v262 = vadd.f32 %v260, 1.0
    %v263 = vmul.f32 %v247, %v261
    %v264 = vmul.f32 %v248, %v262
    %v265 = vmul.f32 %v263, %v239
    %v266 = vmul.f32 %v264, %v244
    %v267 = vld [vmem:[#allocation2] sm:$0xff]
    %v268 = vld [vmem:[#allocation2 + $0x8] sm:$0xff]
    %v269 = vld [vmem:[#allocation9] sm:$0xff]
    %v270 = vld [vmem:[#allocation9 + $0x8] sm:$0xff]
    %v271 = vld [vmem:[#allocation9 + $0x10] sm:$0xff]
    %v272 = vld [vmem:[#allocation9 + $0x18] sm:$0xff]
    %v274 = vsel %vm86, %v265, 0
    %v277 = vsel %vm86, %v266, 0
    %279 = vmatprep.subr.mxu0 0.0
    %280 = vmatpush1.msra.mxu0 %v269
    %281 = vmatprep.subr.mxu0 0.0
    %282 = vmatpush1.msra.mxu0 %v270
    %283 = vmatprep.subr.mxu0 0.0
    %284 = vmatpush1.msra.mxu0 %v271
    %285 = vmatprep.subr.mxu0 0.0
    %286 = vmatpush1.msra.mxu0 %v272
    %287 = vmatprep.subr.mxu0 0.0
    %288 = vmatpush1.msra.mxu0 0.0
    %289 = vmatprep.subr.mxu0 0.0
    %290 = vmatpush1.msra.mxu0 0.0
    %291 = vmatprep.subr.mxu0 0.0
    %292 = vmatpush1.msra.mxu0 0.0
    %293 = vmatprep.subr.mxu0 0.0
    %294 = vmatpush1.msra.mxu0 0.0
    %295 = vmatprep.subr.mxu0 0.0
    %296 = vmatpush1.msra.mxu0 0.0
    %297 = vmatprep.subr.mxu0 0.0
    %298 = vmatpush1.msra.mxu0 0.0
    %299 = vmatprep.subr.mxu0 0.0
    %300 = vmatpush1.msra.mxu0 0.0
    %301 = vmatprep.subr.mxu0 0.0
    %302 = vmatpush1.msra.mxu0 0.0
    %303 = vmatprep.subr.mxu0 0.0
    %304 = vmatpush1.msra.mxu0 0.0
    %305 = vmatprep.subr.mxu0 0.0
    %306 = vmatpush1.msra.mxu0 0.0
    %307 = vmatprep.subr.mxu0 0.0
    %308 = vmatpush1.msra.mxu0 0.0
    %309 = vmatprep.subr.mxu0 0.0
    %310 = vmatpush1.msra.mxu0 0.0
    %311 = vmatprep.subr.mxu0 0.0
    %312 = vmatpush1.msra.mxu0 0.0
    %313 = vmatprep.subr.mxu0 0.0
    %314 = vmatpush1.msra.mxu0 0.0
    %315 = vmatprep.subr.mxu0 0.0
    %316 = vmatpush1.msra.mxu0 0.0
    %317 = vmatprep.subr.mxu0 0.0
    %318 = vmatpush1.msra.mxu0 0.0
    %319 = vmatprep.subr.mxu0 0.0
    %320 = vmatpush1.msra.mxu0 0.0
    %321 = vmatprep.subr.mxu0 0.0
    %322 = vmatpush1.msra.mxu0 0.0
    %323 = vmatprep.subr.mxu0 0.0
    %324 = vmatpush1.msra.mxu0 0.0
    %325 = vmatprep.subr.mxu0 0.0
    %326 = vmatpush1.msra.mxu0 0.0
    %327 = vmatprep.subr.mxu0 0.0
    %328 = vmatpush1.msra.mxu0 0.0
    %329 = vmatprep.subr.mxu0 0.0
    %330 = vmatpush1.msra.mxu0 0.0
    %331 = vmatprep.subr.mxu0 0.0
    %332 = vmatpush1.msra.mxu0 0.0
    %333 = vmatprep.subr.mxu0 0.0
    %334 = vmatpush1.msra.mxu0 0.0
    %335 = vmatprep.subr.mxu0 0.0
    %336 = vmatpush1.msra.mxu0 0.0
    %337 = vmatprep.subr.mxu0 0.0
    %338 = vmatpush1.msra.mxu0 0.0
    %339 = vmatprep.subr.mxu0 0.0
    %340 = vmatpush1.msra.mxu0 0.0
    %341 = vmatprep.subr.mxu0 0.0
    %342 = vmatpush1.msra.mxu0 0.0
    %343 = vmatprep.mubr.f32.mxu0 0.0
    %344 = vmatmul.mubr.f32.gmra.mrb[0].mxu0 %v274
    %v345 = vpop.f32.mrb[0].mxu0
    %v346 = vadd.f32 0.0, %v345
    %v347 = vpop.f32.mrb[0].mxu0
    %348 = vmatprep.mubr.f32.mxu0 0.0
    %349 = vmatmul.mubr.f32.gmra.mrb[0].mxu0 %v277
    %v350 = vpop.f32.mrb[0].mxu0
    %v351 = vadd.f32 0.0, %v350
    %v352 = vpop.f32.mrb[0].mxu0
    %353 = vdwg.mxu0
    %v354 = vadd.f32 %v267, %v346
    %v355 = vadd.f32 %v268, %v351
    %356 = vst.msk [vmem:[#allocation2] sm:$0xff] %vm86, %v354
    %357 = vst.msk [vmem:[#allocation2 + $0x8] sm:$0xff] %vm86, %v355
    // Predicated region
    $region38: #{tpu_custom_call.1} parent=1 // pred_check
      %p358 = pneg %p73
    $region39: #{tpu_custom_call.1} parent=1 // pred_check_branch
      %360 = sbr.rel (%p358) target = $region41
    $region40: #{tpu_custom_call.1} parent=1 // pred_region
      %v361 = vld [vmem:[#allocation2] sm:$0xff]
      %v362 = vld [vmem:[#allocation2 + $0x8] sm:$0xff]
      %363 = vst.msk [vmem:[#allocation11] sm:$0xff] %vm86, %v361
      %364 = vst.msk [vmem:[#allocation11 + $0x8] sm:$0xff] %vm86, %v362
    $region41: #{tpu_custom_call.1} parent=1 // pred_fallthru
      _
    // Predicated region
    $region42: #{tpu_custom_call.1} parent=1 // pred_check
      _
    $region43: #{tpu_custom_call.1} parent=1 // pred_check_branch
      %366 = sbr.rel (0) target = $region45
    $region44: #{tpu_custom_call.1} parent=1 // pred_region
      %s368 = ssub.s32 256, 256
      %369 = vsyncadd [#allocation5], %s368
      %s370 = sshll.u32 [#allocation11], 4
      %s371 = int_to_ptr.vmem [resolvable:$true] %s370
      %376 = dma.vmem_to_hbm [thread:$0]  %s371, 256, %s4, [#allocation5], 128, 128, 8
    $region45: #{tpu_custom_call.1} parent=1 // pred_fallthru
      _
    // Predicated region
    $region46: #{tpu_custom_call.1} parent=1 // pred_check
      _
    $region47: #{tpu_custom_call.1} parent=1 // pred_check_branch
      %378 = sbr.rel (0) target = $region49
    $region48: #{tpu_custom_call.1} parent=1 // pred_region
      %379 = dma.done [#allocation5], 256
    $region49: #{tpu_custom_call.1} parent=1 // pred_fallthru
      _
    %380 = vsyncpa [#allocation4], 1
    %381 = vsyncpa [#allocation7], 1
    %382 = vsyncpa [#allocation10], 1
    %383 = vsyncpa [#allocation5], 1

</llo_original>
